<compile_context>
chip_gen: v7x
topology: tpu7x:2x2x1
jax: 0.10.0
libtpu: 0.0.40
codegen_flags: <defaults>
</compile_context>

<pallas_src>
import jax
import jax.numpy as jnp
from jax.experimental import pallas as pl
from jax.experimental.pallas import tpu as pltpu


def _round_up(x, m):
    return ((x + m - 1) // m) * m


# ----------------------------------------------------------------------------
# Pallas kernels
# ----------------------------------------------------------------------------
def _patch_proj_kernel_single_k(x_ref, w_ref, b_ref, o_ref):
    # Whole K in one step: no accumulator scratch, write biased result directly.
    o_ref[...] = (jnp.dot(x_ref[...], w_ref[...],
                          preferred_element_type=jnp.float32)
                  + b_ref[...]).astype(o_ref.dtype)


def _patch_proj_kernel_multi_k(x_ref, w_ref, b_ref, o_ref, acc_ref):
    k = pl.program_id(1)

    @pl.when(k == 0)
    def _():
        acc_ref[...] = jnp.zeros_like(acc_ref)

    acc_ref[...] += jnp.dot(x_ref[...], w_ref[...],
                            preferred_element_type=jnp.float32)

    @pl.when(k == pl.num_programs(1) - 1)
    def _():
        o_ref[...] = (acc_ref[...] + b_ref[...]).astype(o_ref.dtype)


def _patch_proj(patches, weight_mat, bias):
    """patches: (M, K), weight_mat: (K, N), bias: (N,) -> (M, N) f32."""
    M, K = patches.shape
    N = weight_mat.shape[1]

    # Lane-dense output: pad N up to a multiple of 128 (zero cols / zero bias).
    N_pad = _round_up(N, 128)

    # K tiling: full K per step when small; 512-wide chunks otherwise so the
    # per-step VMEM footprint stays small (portable to v7x's 64 MiB VMEM).
    tk = min(512, _round_up(K, 128))
    K_pad = _round_up(K, tk)

    # M tiling: large tiles amortize grid-step overhead; for small M still aim
    # for >= 2 grid steps on the "parallel" axis so both v7x TCs get work.
    TM = 256
    if M >= 2 * TM:
        tm = TM
    else:
        tm = max(8, min(TM, _round_up(pl.cdiv(M, 2), 8)))
    M_pad = _round_up(M, tm)

    # bf16 operands (fast MXU path on v5e/v6e/v7x); zero-padding of K/N/M rows
    # and columns contributes nothing to the dot product / bias add.  Skip the
    # padded copy entirely when already aligned (saves an HBM pass).
    x_bf = patches.astype(jnp.bfloat16)
    if (M_pad, K_pad) != (M, K):
        x_bf = jnp.zeros((M_pad, K_pad), jnp.bfloat16).at[:M, :K].set(x_bf)

    w_bf = weight_mat.astype(jnp.bfloat16)
    if (K_pad, N_pad) != (K, N):
        w_bf = jnp.zeros((K_pad, N_pad), jnp.bfloat16).at[:K, :N].set(w_bf)

    b_f32 = bias.astype(jnp.float32).reshape(1, N)
    if N_pad != N:
        b_f32 = jnp.zeros((1, N_pad), jnp.float32).at[:, :N].set(b_f32)

    num_k_steps = K_pad // tk

    cost = pl.CostEstimate(
        flops=2 * M_pad * K_pad * N_pad,
        transcendentals=0,
        bytes_accessed=(M_pad * K_pad * 2 + K_pad * N_pad * 2
                        + M_pad * N_pad * 4 + N_pad * 4),
    )

    if num_k_steps == 1:
        grid_spec = pltpu.PrefetchScalarGridSpec(
            num_scalar_prefetch=0,
            grid=(M_pad // tm,),
            in_specs=[
                pl.BlockSpec((tm, K_pad), lambda i: (i, 0)),
                pl.BlockSpec((K_pad, N_pad), lambda i: (0, 0)),
                pl.BlockSpec((1, N_pad), lambda i: (0, 0)),
            ],
            out_specs=pl.BlockSpec((tm, N_pad), lambda i: (i, 0)),
        )
        kernel = _patch_proj_kernel_single_k
        dim_sem = ("parallel",)
    else:
        grid_spec = pltpu.PrefetchScalarGridSpec(
            num_scalar_prefetch=0,
            grid=(M_pad // tm, num_k_steps),
            in_specs=[
                pl.BlockSpec((tm, tk), lambda i, k: (i, k)),
                pl.BlockSpec((tk, N_pad), lambda i, k: (k, 0)),
                pl.BlockSpec((1, N_pad), lambda i, k: (0, 0)),
            ],
            out_specs=pl.BlockSpec((tm, N_pad), lambda i, k: (i, 0)),
            scratch_shapes=[pltpu.VMEM((tm, N_pad), jnp.float32)],
        )
        kernel = _patch_proj_kernel_multi_k
        dim_sem = ("parallel", "arbitrary")

    out_padded = pl.pallas_call(
        kernel,
        out_shape=jax.ShapeDtypeStruct((M_pad, N_pad), jnp.float32),
        grid_spec=grid_spec,
        compiler_params=pltpu.CompilerParams(dimension_semantics=dim_sem),
        cost_estimate=cost,
    )(x_bf, w_bf, b_f32)

    if (M_pad, N_pad) != (M, N):
        out_padded = out_padded[:M, :N]
    return out_padded


# ----------------------------------------------------------------------------
# Module-equivalent wrapper
# ----------------------------------------------------------------------------
class ImageToPatch3D:
    """JAX/Pallas equivalent of the PyTorch ImageToPatch3D module (normalization_layer=None)."""

    def __init__(self, img_dims, patch_dims, in_channels, out_channels, key):
        self.img_dims = img_dims
        self.patch_dims = patch_dims
        self.in_channels = in_channels
        self.out_channels = out_channels

        depth, height, width = img_dims
        pd, ph, pw = patch_dims

        def _pad_amounts(size, patch):
            mod = size % patch
            if mod:
                pad = patch - mod
                return pad // 2, pad - pad // 2
            return 0, 0

        # NOTE: mirrors the reference quirk — depth padding is computed from
        # img_dims[0], which the forward assert treats as the channel count C.
        # If the runtime depth D is not patch-aligned after this padding, the
        # patch reshape below will fail (same as the reference would misbehave).
        self.pad_front, self.pad_back = _pad_amounts(depth, pd)
        self.pad_top, self.pad_bottom = _pad_amounts(height, ph)
        self.pad_left, self.pad_right = _pad_amounts(width, pw)

        # Conv3d parameter shapes: weight (O, C, pd, ph, pw), bias (O,)
        kw, kb = jax.random.split(key)
        fan_in = in_channels * pd * ph * pw
        bound = 1.0 / (fan_in ** 0.5)
        self.weight = jax.random.uniform(
            kw, (out_channels, in_channels, pd, ph, pw),
            minval=-bound, maxval=bound, dtype=jnp.float32)
        self.bias = jax.random.uniform(
            kb, (out_channels,), minval=-bound, maxval=bound, dtype=jnp.float32)

        # TODO(synk): normalization_layer (LayerNorm over channels) not implemented; default is None.

    def __call__(self, x):
        # x: (B, C, D, H, W), same axis convention as PyTorch.
        B, C, D, H, W = x.shape
        # Mirror the (quirky) assert of the reference module verbatim.
        assert (C == self.img_dims[0] and H == self.img_dims[1]
                and W == self.img_dims[2]), (
            f"输入图像尺寸 ({D}x{H}x{W}) 与模型预期 "
            f"({self.img_dims[0]}x{self.img_dims[1]}x{self.img_dims[2]}) 不符。")

        pd, ph, pw = self.patch_dims

        # ZeroPad3d (left/right -> W, top/bottom -> H, front/back -> D).
        # Skip entirely when no padding is needed (saves an HBM pass).
        pads = (self.pad_front, self.pad_back, self.pad_top, self.pad_bottom,
                self.pad_left, self.pad_right)
        if any(pads):
            x = jnp.pad(
                x,
                ((0, 0), (0, 0),
                 (self.pad_front, self.pad_back),
                 (self.pad_top, self.pad_bottom),
                 (self.pad_left, self.pad_right)))

        _, _, Dp_, Hp_, Wp_ = x.shape
        Dp, Hp, Wp = Dp_ // pd, Hp_ // ph, Wp_ // pw

        # Rearrange to patch matrix: (B, C, Dp, pd, Hp, ph, Wp, pw)
        #   -> (B, Dp, Hp, Wp, C, pd, ph, pw) -> (M, K)
        # TODO(synk): for very large inputs, fuse this patch extraction into the
        # kernel (gather-style index_map) to avoid the explicit transpose pass.
        xp = x.reshape(B, C, Dp, pd, Hp, ph, Wp, pw)
        xp = jnp.transpose(xp, (0, 2, 4, 6, 1, 3, 5, 7))
        K = C * pd * ph * pw
        M = B * Dp * Hp * Wp
        patches = xp.reshape(M, K)

        # Conv weight (O, C, pd, ph, pw) -> (K, O): same K ordering as patches
        # (tiny, reordered once on the weight side).
        w_mat = self.weight.reshape(self.out_channels, K).T

        # Hot path: GEMM + bias inside the Pallas kernel.
        out = _patch_proj(patches, w_mat, self.bias)           # (M, O) f32

        # Back to Conv3d output layout (B, O, Dp, Hp, Wp) to preserve module
        # semantics. (If downstream tolerates channels-last, skip this transpose.)
        out = out.reshape(B, Dp, Hp, Wp, self.out_channels)
        out = jnp.transpose(out, (0, 4, 1, 2, 3))
        return out


# ----------------------------------------------------------------------------
# Reference (pure JAX conv) for verification — bf16 operands / f32 accumulation
# to match the kernel's numerics.
# ----------------------------------------------------------------------------
def _reference_forward(module, x):
    pads = (module.pad_front, module.pad_back, module.pad_top,
            module.pad_bottom, module.pad_left, module.pad_right)
    if any(pads):
        x = jnp.pad(
            x,
            ((0, 0), (0, 0),
             (module.pad_front, module.pad_back),
             (module.pad_top, module.pad_bottom),
             (module.pad_left, module.pad_right)))
    out = jax.lax.conv_general_dilated(
        x.astype(jnp.bfloat16), module.weight.astype(jnp.bfloat16),
        window_strides=module.patch_dims,
        padding="VALID",
        dimension_numbers=("NCDHW", "OIDHW", "NCDHW"),
        preferred_element_type=jnp.float32)
    return out + module.bias.reshape(1, -1, 1, 1, 1)


if __name__ == "__main__":
    key = jax.random.PRNGKey(0)
    k_param, k_x = jax.random.split(key)

    # Small shapes consistent with the module's forward:
    #   img_dims = (C, H, W) per the reference assert; patch_dims = (pd, ph, pw).
    B = 2
    in_channels = 4
    out_channels = 32
    D, H, W = 4, 16, 16
    img_dims = (in_channels, H, W)       # assert checks C, H, W against img_dims
    patch_dims = (2, 4, 4)

    module = ImageToPatch3D(img_dims, patch_dims, in_channels, out_channels, k_param)

    x = jax.random.normal(k_x, (B, in_channels, D, H, W), dtype=jnp.float32)

    out = module(x)
    out = jax.block_until_ready(out)

    ref = jax.block_until_ready(_reference_forward(module, x))
    assert out.shape == ref.shape == (B, out_channels, D // 2, H // 4, W // 4)
    # bf16 operands / f32 accumulation on both sides -> tight-ish tolerance.
    assert jnp.allclose(out, ref, atol=2e-3, rtol=2e-3), (
        float(jnp.max(jnp.abs(out - ref))))

    print("KERNEL_OK")
</pallas_src>

<mosaic_0001>
module attributes {stable_mosaic.version = 11 : i64} {
  func.func @_patch_proj_kernel_single_k(%arg0: i32, %arg1: memref<32x128xbf16, #tpu.memory_space<vmem>>, %arg2: memref<128x128xbf16, #tpu.memory_space<vmem>>, %arg3: memref<1x128xf32, #tpu.memory_space<vmem>>, %arg4: memref<32x128xf32, #tpu.memory_space<vmem>>) attributes {dimension_semantics = [#tpu.dimension_semantics<parallel>], iteration_bounds = array<i64: 2>, scalar_prefetch = 0 : i64, scratch_operands = 0 : i64, tpu.core_type = #tpu.core_type<tc>, window_params = [{transform_indices = @transform_0, window_bounds = array<i64: 32, 128>}, {pipeline_mode = #tpu.pipeline_mode<synchronous>, transform_indices = @transform_1, window_bounds = array<i64: 128, 128>}, {pipeline_mode = #tpu.pipeline_mode<synchronous>, transform_indices = @transform_2, window_bounds = array<i64: 1, 128>}, {transform_indices = @transform_3, window_bounds = array<i64: 32, 128>}]} {
    %c0 = arith.constant 0 : index
    %c0_0 = arith.constant 0 : index
    %0 = vector.load %arg1[%c0, %c0_0] : memref<32x128xbf16, #tpu.memory_space<vmem>>, vector<32x128xbf16>
    %c0_1 = arith.constant 0 : index
    %c0_2 = arith.constant 0 : index
    %1 = vector.load %arg2[%c0_1, %c0_2] : memref<128x128xbf16, #tpu.memory_space<vmem>>, vector<128x128xbf16>
    %cst = arith.constant dense<0.000000e+00> : vector<32x128xf32>
    %2 = tpu.matmul %0, %1, %cst {dimension_numbers = #tpu.dot_dimension_numbers<[1], [0], [0], [1], [0, 0, 1, 1], [], []>} : vector<32x128xbf16>, vector<128x128xbf16>, vector<32x128xf32> -> vector<32x128xf32>
    %c0_3 = arith.constant 0 : index
    %c0_4 = arith.constant 0 : index
    %3 = vector.load %arg3[%c0_3, %c0_4] : memref<1x128xf32, #tpu.memory_space<vmem>>, vector<1x128xf32>
    %4 = vector.broadcast %3 : vector<1x128xf32> to vector<32x128xf32>
    %5 = arith.addf %2, %4 : vector<32x128xf32>
    %c0_5 = arith.constant 0 : index
    %c0_6 = arith.constant 0 : index
    %6 = vector.load %arg4[%c0_5, %c0_6] : memref<32x128xf32, #tpu.memory_space<vmem>>, vector<32x128xf32>
    tpu.vector_store %arg4[%c0_5, %c0_6], %5 {strides = array<i32>} : memref<32x128xf32, #tpu.memory_space<vmem>>, vector<32x128xf32>,
    return
  }
  func.func @transform_0(%arg0: i32) -> (i32, i32) {
    %c0_i32 = arith.constant 0 : i32
    %c0_i32_0 = arith.constant 0 : i32
    return %arg0, %c0_i32 : i32, i32
  }
  func.func @transform_1(%arg0: i32) -> (i32, i32) {
    %c0_i32 = arith.constant 0 : i32
    %c0_i32_0 = arith.constant 0 : i32
    %c0_i32_1 = arith.constant 0 : i32
    return %c0_i32, %c0_i32_0 : i32, i32
  }
  func.func @transform_2(%arg0: i32) -> (i32, i32) {
    %c0_i32 = arith.constant 0 : i32
    %c0_i32_0 = arith.constant 0 : i32
    %c0_i32_1 = arith.constant 0 : i32
    return %c0_i32, %c0_i32_0 : i32, i32
  }
  func.func @transform_3(%arg0: i32) -> (i32, i32) {
    %c0_i32 = arith.constant 0 : i32
    %c0_i32_0 = arith.constant 0 : i32
    return %arg0, %c0_i32 : i32, i32
  }
}

</mosaic_0001>

<llo_original>
// kernel: tpu_custom_call.1
$region0: #{tpu_custom_call.1}
  #allocation0 [shape = 'u32[]', space=smem, size = 0x4, offset = 0x4, fixed_abs, tag = 'smem constant byte address 0x4 - core index']
  #allocation1 [shape = 'u32[144,128]{1,0:T(1,128)}', space=vmem, size = 0x12000, scoped, tag = 'internal scratch']
  %s0 = inlined_call_operand.hbm [shape: bf16[64,128], index: 0, kind: input, shape index: {}]
  %s1 = inlined_call_operand.hbm [shape: bf16[128,128], index: 1, kind: input, shape index: {}]
  %s2 = inlined_call_operand.vmem [shape: f32[1,128], index: 2, kind: input, shape index: {}]
  %s3 = inlined_call_operand.hbm [shape: f32[64,128], index: 3, kind: output, shape index: {}]
  %s4 = sld [smem:[#allocation0]]
  $region53: #{tpu_custom_call.1} parent=0
    _
  %s6 = ssub.s32 1, %s4
  %s7 = scalar_select 0, %s6, %s4
  $region1: #{tpu_custom_call.1} parent=0
    #allocation2 [shape = 'u8[16384]{0}', space=vmem, size = 0x4000, scoped, tag = 'input window, operand 0']
    #allocation3 [shape = 's32[2]{0}', space=sflag, size = 0x8, scoped, tag = 'scoped memory for tpu_custom_call.1']
    #allocation4 [shape = 's32[2]{0}', space=sflag, size = 0x8, scoped, tag = 'scoped memory for tpu_custom_call.1']
    #allocation5 [shape = 'u8[32768]{0}', space=vmem, size = 0x8000, scoped, tag = 'input window, operand 1, single buffered']
    #allocation6 [shape = 's32[1]{0}', space=sflag, size = 0x4, scoped, tag = 'scoped memory for tpu_custom_call.1']
    #allocation7 [shape = 'u8[32768]{0}', space=vmem, size = 0x8000, scoped, tag = 'output window, operand 0']
    %8 = vsyncpa [#allocation3], 0
    %s9 = scalar_lea.sflag [#allocation3], 1
    %10 = vsyncpa %s9, 0
    %11 = vsyncpa [#allocation6], 0
    %12 = vsyncpa [#allocation4], 0
    %s13 = scalar_lea.sflag [#allocation4], 1
    %14 = vsyncpa %s13, 0
    loop: start=0, step=1, limit=4
    $region2: #{tpu_custom_call.1} parent=1 // loop_pre_header
      _
    $region3: #{tpu_custom_call.1} parent=1 // loop_header
      %s16 = sphi 0, %s20
      %p17 = scmp.ge.s32.totalorder %s16, 4
      %s26 = sphi 0, %s28
      %s29 = sphi 0, %s26
      %s30 = sphi 0, %s29
      %s46 = sphi 0, %s30
      %s50 = sphi 0, %s50
      %s52 = sphi 0, %s50
      %s53 = sphi 0, %s52
      %s67 = sphi 0, %s53
      %s71 = sphi 0, %s71
      %s73 = sphi 0, %s71
      %s74 = sphi 0, %s73
      %s88 = sphi 0, %s74
      %s94 = sphi 0, %s96
      %s97 = sphi 0, %s94
      %s98 = sphi 0, %s97
      %s114 = sphi 0, %s98
    $region4: #{tpu_custom_call.1} parent=1 // loop_header_branch
      %19 = sbr.rel (%p17) target = $region8
    $region5: #{tpu_custom_call.1} parent=1 // loop_body
      %s21 = ssub.s32 %s16, 1
      %s22 = ssub.s32 %s16, 2
      %s23 = sadd.s32 %s16, 1
      %s24 = ssub.s32 %s16, %s23
      %p25 = scmp.eq.s32.totalorder %s24, 0
      %s27 = sadd.s32 %s26, 1
      %s28 = scalar_select %p25, %s26, %s27
      %p31 = pneg %p25
      %p32 = scmp.eq.s32.totalorder %s16, 1
      %p33 = por %p31, %p32
      %p34 = scmp.ne.s32.totalorder %s26, %s29
      %p35 = scmp.eq.s32.totalorder %s16, 0
      %p36 = por %p34, %p35
      %p37 = scmp.ne.s32.totalorder %s26, %s29
      %p38 = scmp.eq.s32.totalorder %s21, 1
      %p39 = por %p37, %p38
      %p40 = scmp.ne.s32.totalorder %s29, %s30
      %p41 = scmp.eq.s32.totalorder %s21, 0
      %p42 = por %p40, %p41
      %p43 = scmp.ne.s32.totalorder %s29, %s30
      %p44 = scmp.eq.s32.totalorder %s22, 1
      %p45 = por %p43, %p44
      %p47 = scmp.ne.s32.totalorder %s30, %s46
      %p48 = scmp.eq.s32.totalorder %s22, 0
      %p49 = por %p47, %p48
      %s51 = sadd.s32 %s50, 1
      %p54 = scmp.eq.s32.totalorder %s16, 1
      %p55 = scmp.ne.s32.totalorder %s50, %s52
      %p56 = scmp.eq.s32.totalorder %s16, 0
      %p57 = por %p55, %p56
      %p58 = scmp.ne.s32.totalorder %s50, %s52
      %p59 = scmp.eq.s32.totalorder %s21, 1
      %p60 = por %p58, %p59
      %p61 = scmp.ne.s32.totalorder %s52, %s53
      %p62 = scmp.eq.s32.totalorder %s21, 0
      %p63 = por %p61, %p62
      %p64 = scmp.ne.s32.totalorder %s52, %s53
      %p65 = scmp.eq.s32.totalorder %s22, 1
      %p66 = por %p64, %p65
      %p68 = scmp.ne.s32.totalorder %s53, %s67
      %p69 = scmp.eq.s32.totalorder %s22, 0
      %p70 = por %p68, %p69
      %s72 = sadd.s32 %s71, 1
      %p75 = scmp.eq.s32.totalorder %s16, 1
      %p76 = scmp.ne.s32.totalorder %s71, %s73
      %p77 = scmp.eq.s32.totalorder %s16, 0
      %p78 = por %p76, %p77
      %p79 = scmp.ne.s32.totalorder %s71, %s73
      %p80 = scmp.eq.s32.totalorder %s21, 1
      %p81 = por %p79, %p80
      %p82 = scmp.ne.s32.totalorder %s73, %s74
      %p83 = scmp.eq.s32.totalorder %s21, 0
      %p84 = por %p82, %p83
      %p85 = scmp.ne.s32.totalorder %s73, %s74
      %p86 = scmp.eq.s32.totalorder %s22, 1
      %p87 = por %p85, %p86
      %p89 = scmp.ne.s32.totalorder %s74, %s88
      %p90 = scmp.eq.s32.totalorder %s22, 0
      %p91 = por %p89, %p90
      %s92 = ssub.s32 %s16, %s23
      %p93 = scmp.eq.s32.totalorder %s92, 0
      %s95 = sadd.s32 %s94, 1
      %s96 = scalar_select %p93, %s94, %s95
      %p99 = pneg %p93
      %p100 = scmp.eq.s32.totalorder %s16, 1
      %p101 = por %p99, %p100
      %p102 = scmp.ne.s32.totalorder %s94, %s97
      %p103 = scmp.eq.s32.totalorder %s16, 0
      %p104 = por %p102, %p103
      %p105 = scmp.ne.s32.totalorder %s94, %s97
      %p106 = scmp.eq.s32.totalorder %s21, 1
      %p107 = por %p105, %p106
      %p108 = scmp.ne.s32.totalorder %s97, %s98
      %p109 = scmp.eq.s32.totalorder %s21, 0
      %p110 = por %p108, %p109
      %p111 = scmp.ne.s32.totalorder %s97, %s98
      %p112 = scmp.eq.s32.totalorder %s22, 1
      %p113 = por %p111, %p112
      %p115 = scmp.ne.s32.totalorder %s98, %s114
      %p116 = scmp.eq.s32.totalorder %s22, 0
      %p117 = por %p115, %p116
      %p118 = scmp.le.s32.totalorder 1, %s16
      %p119 = scmp.lt.s32.totalorder %s16, 3
      %p120 = pnand %p118, %p119
      %p121 = pneg %p120
      // Predicated region
      $region9: #{tpu_custom_call.1} parent=5 // pred_check
        _
      $region10: #{tpu_custom_call.1} parent=5 // pred_check_branch
        %123 = sbr.rel (%p120) target = $region12
      $region11: #{tpu_custom_call.1} parent=5 // pred_region
        %s124 = ssub.s32 %s16, 1
        // Predicated region
        $region13: #{tpu_custom_call.1} parent=11 // pred_check
          %p125 = pneg %p63
        $region14: #{tpu_custom_call.1} parent=11 // pred_check_branch
          %127 = sbr.rel (%p125) target = $region16
        $region15: #{tpu_custom_call.1} parent=11 // pred_region
          %s129 = ssub.s32 1024, 1024
          %130 = vsyncadd [#allocation6], %s129
          %s131 = sshll.u32 [#allocation5], 4
          %s132 = int_to_ptr.vmem [resolvable:$true] %s131
          %137 = dma.hbm_to_vmem [thread:$0]  %s1, 1024, %s132, [#allocation6], 64, 64, 4
        $region16: #{tpu_custom_call.1} parent=11 // pred_fallthru
          _
        // Predicated region
        $region17: #{tpu_custom_call.1} parent=11 // pred_check
          %p138 = pneg %p84
        $region18: #{tpu_custom_call.1} parent=11 // pred_check_branch
          %140 = sbr.rel (%p138) target = $region20
        $region19: #{tpu_custom_call.1} parent=11 // pred_region
          _
        $region20: #{tpu_custom_call.1} parent=11 // pred_fallthru
          _
      $region12: #{tpu_custom_call.1} parent=5 // pred_fallthru
        _
      %p141 = scmp.lt.s32.totalorder %s16, 2
      // Predicated region
      $region21: #{tpu_custom_call.1} parent=5 // pred_check
        %p142 = pneg %p141
      $region22: #{tpu_custom_call.1} parent=5 // pred_check_branch
        %144 = sbr.rel (%p142) target = $region24
      $region23: #{tpu_custom_call.1} parent=5 // pred_region
        // Predicated region
        $region25: #{tpu_custom_call.1} parent=23 // pred_check
          %p145 = pneg %p36
        $region26: #{tpu_custom_call.1} parent=23 // pred_check_branch
          %147 = sbr.rel (%p145) target = $region28
        $region27: #{tpu_custom_call.1} parent=23 // pred_region
          %s148 = sand.u32 %s26, 1
          %s149 = scalar_lea.sflag [#allocation3], %s148
          %s150 = sand.u32 %s26, 1
          %s151 = smul.addr %s150, 16
          %s152 = scalar_lea.vmem [#allocation2], %s151
          %s153 = smul.u32 4, %s16
          %s155 = ssub.s32 256, 256
          %156 = vsyncadd %s149, %s155
          %s157 = smul.addr %s153, 64
          %s158 = scalar_lea.hbm %s0, %s157
          %s159 = sshll.u32 %s152, 4
          %s160 = int_to_ptr.vmem [resolvable:$true] %s159
          %165 = dma.hbm_to_vmem [thread:$0]  %s158, 256, %s160, %s149, 64, 64, 4
        $region28: #{tpu_custom_call.1} parent=23 // pred_fallthru
          _
      $region24: #{tpu_custom_call.1} parent=5 // pred_fallthru
        _
      %p166 = scmp.le.s32.totalorder 1, %s16
      %p167 = scmp.lt.s32.totalorder %s16, 3
      %p168 = pnand %p166, %p167
      %p169 = pneg %p168
      // Predicated region
      $region29: #{tpu_custom_call.1} parent=5 // pred_check
        _
      $region30: #{tpu_custom_call.1} parent=5 // pred_check_branch
        %171 = sbr.rel (%p168) target = $region32
      $region31: #{tpu_custom_call.1} parent=5 // pred_region
        %s172 = ssub.s32 %s16, 1
        %s173 = sand.u32 %s29, 1
        %s174 = scalar_lea.sflag [#allocation3], %s173
        %s175 = sand.u32 %s29, 1
        %s176 = smul.addr %s175, 16
        %s177 = scalar_lea.vmem [#allocation2], %s176
        // Predicated region
        $region33: #{tpu_custom_call.1} parent=31 // pred_check
          %p178 = pneg %p42
        $region34: #{tpu_custom_call.1} parent=31 // pred_check_branch
          %180 = sbr.rel (%p178) target = $region36
        $region35: #{tpu_custom_call.1} parent=31 // pred_region
          %181 = dma.done %s174, 256
        $region36: #{tpu_custom_call.1} parent=31 // pred_fallthru
          _
        // Predicated region
        $region37: #{tpu_custom_call.1} parent=31 // pred_check
          %p182 = pneg %p63
        $region38: #{tpu_custom_call.1} parent=31 // pred_check_branch
          %184 = sbr.rel (%p182) target = $region40
        $region39: #{tpu_custom_call.1} parent=31 // pred_region
          %185 = dma.done [#allocation6], 1024
        $region40: #{tpu_custom_call.1} parent=31 // pred_fallthru
          _
        %s186 = sand.u32 %s29, 1
        %s187 = scalar_lea.sflag [#allocation3], %s186
        %s188 = sand.u32 %s29, 1
        %s189 = smul.addr %s188, 16
        %s190 = scalar_lea.vmem [#allocation2], %s189
        %p191 = pneg %p42
        %p192 = pneg %p39
        %p193 = pneg %p63
        %p194 = pneg %p60
        %p195 = pneg %p84
        %p196 = pneg %p81
        %p197 = pneg %p110
        %p198 = pneg %p107
        %s199 = sand.u32 %s97, 1
        %s200 = scalar_lea.sflag [#allocation4], %s199
        %s201 = sand.u32 %s97, 1
        %s202 = smul.addr %s201, 32
        %s203 = scalar_lea.vmem [#allocation7], %s202
        %s204 = smul.u32 4, %s21
        %s205 = smul.u32 4, %s21
        %v207 = vld [vmem:[%s177] sm:$0xf]
        %v208 = vld [vmem:[%s177 + $0x4] sm:$0xf]
        %v209 = vld [vmem:[%s177 + $0x8] sm:$0xf]
        %v210 = vld [vmem:[%s177 + $0xc] sm:$0xf]
        %v211 = vld [vmem:[#allocation5] sm:$0xf]
        %v212 = vld [vmem:[#allocation5 + $0x4] sm:$0xf]
        %v213 = vld [vmem:[#allocation5 + $0x8] sm:$0xf]
        %v214 = vld [vmem:[#allocation5 + $0xc] sm:$0xf]
        %v215 = vld [vmem:[#allocation5 + $0x10] sm:$0xf]
        %v216 = vld [vmem:[#allocation5 + $0x14] sm:$0xf]
        %v217 = vld [vmem:[#allocation5 + $0x18] sm:$0xf]
        %v218 = vld [vmem:[#allocation5 + $0x1c] sm:$0xf]
        %v219 = vld [vmem:[#allocation5 + $0x20] sm:$0xf]
        %v220 = vld [vmem:[#allocation5 + $0x24] sm:$0xf]
        %v221 = vld [vmem:[#allocation5 + $0x28] sm:$0xf]
        %v222 = vld [vmem:[#allocation5 + $0x2c] sm:$0xf]
        %v223 = vld [vmem:[#allocation5 + $0x30] sm:$0xf]
        %v224 = vld [vmem:[#allocation5 + $0x34] sm:$0xf]
        %v225 = vld [vmem:[#allocation5 + $0x38] sm:$0xf]
        %v226 = vld [vmem:[#allocation5 + $0x3c] sm:$0xf]
        %v227 = vld [vmem:[%s2] sm:$0x1]
        %v229 = vlaneseq
        %v230 = vshrl.u32 %v229, 7
        %v231 = vsub.s32 0, %v230
        %v232 = vrot.slane %v227, %v231
        %v238 = vunpack.c.l.b16 %v207
        %v239 = vunpack.c.l.b16 %v208
        %v240 = vunpack.c.l.b16 %v209
        %v241 = vunpack.c.l.b16 %v210
        %v242 = vpack.c.b16 %v239, %v238
        %v243 = vpack.c.b16 %v241, %v240
        %v262 = vunpack.c.l.b16 %v211
        %v263 = vunpack.c.l.b16 %v212
        %v264 = vunpack.c.l.b16 %v213
        %v265 = vunpack.c.l.b16 %v214
        %v266 = vunpack.c.l.b16 %v215
        %v267 = vunpack.c.l.b16 %v216
        %v268 = vunpack.c.l.b16 %v217
        %v269 = vunpack.c.l.b16 %v218
        %v270 = vunpack.c.l.b16 %v219
        %v271 = vunpack.c.l.b16 %v220
        %v272 = vunpack.c.l.b16 %v221
        %v273 = vunpack.c.l.b16 %v222
        %v274 = vunpack.c.l.b16 %v223
        %v275 = vunpack.c.l.b16 %v224
        %v276 = vunpack.c.l.b16 %v225
        %v277 = vunpack.c.l.b16 %v226
        %v278 = vpack.c.b16 %v263, %v262
        %v279 = vpack.c.b16 %v265, %v264
        %v280 = vpack.c.b16 %v267, %v266
        %v281 = vpack.c.b16 %v269, %v268
        %v282 = vpack.c.b16 %v271, %v270
        %v283 = vpack.c.b16 %v273, %v272
        %v284 = vpack.c.b16 %v275, %v274
        %v285 = vpack.c.b16 %v277, %v276
        %294 = vmatprep.subr.bf16.mxu0 0
        %295 = vmatpush1.bf16.msra.mxu0 %v278
        %296 = vmatprep.subr.bf16.mxu0 0
        %297 = vmatpush1.bf16.msra.mxu0 %v279
        %298 = vmatprep.subr.bf16.mxu0 0
        %299 = vmatpush1.bf16.msra.mxu0 %v280
        %300 = vmatprep.subr.bf16.mxu0 0
        %301 = vmatpush1.bf16.msra.mxu0 %v281
        %302 = vmatprep.subr.bf16.mxu0 0
        %303 = vmatpush1.bf16.msra.mxu0 %v282
        %304 = vmatprep.subr.bf16.mxu0 0
        %305 = vmatpush1.bf16.msra.mxu0 %v283
        %306 = vmatprep.subr.bf16.mxu0 0
        %307 = vmatpush1.bf16.msra.mxu0 %v284
        %308 = vmatprep.subr.bf16.mxu0 0
        %309 = vmatpush1.bf16.msra.mxu0 %v285
        %310 = vmatprep.subr.bf16.mxu0 0
        %311 = vmatpush1.bf16.msra.mxu0 0
        %312 = vmatprep.subr.bf16.mxu0 0
        %313 = vmatpush1.bf16.msra.mxu0 0
        %314 = vmatprep.subr.bf16.mxu0 0
        %315 = vmatpush1.bf16.msra.mxu0 0
        %316 = vmatprep.subr.bf16.mxu0 0
        %317 = vmatpush1.bf16.msra.mxu0 0
        %318 = vmatprep.subr.bf16.mxu0 0
        %319 = vmatpush1.bf16.msra.mxu0 0
        %320 = vmatprep.subr.bf16.mxu0 0
        %321 = vmatpush1.bf16.msra.mxu0 0
        %322 = vmatprep.subr.bf16.mxu0 0
        %323 = vmatpush1.bf16.msra.mxu0 0
        %324 = vmatprep.subr.bf16.mxu0 0
        %325 = vmatpush1.bf16.msra.mxu0 0
        %326 = vmatprep.mubr.bf16.mxu0 0
        %327 = vmatmul.mubr.bf16.gmra.mrb[0].mxu0 %v242
        %v328 = vpop.f32.mrb[0].mxu0
        %v329 = vadd.f32 %v232, %v328
        %v330 = vpop.f32.mrb[0].mxu0
        %v331 = vpop.f32.mrb[0].mxu0
        %v332 = vadd.f32 %v232, %v331
        %v333 = vpop.f32.mrb[0].mxu0
        %334 = vmatprep.mubr.bf16.mxu0 0
        %335 = vmatmul.mubr.bf16.gmra.mrb[0].mxu0 %v243
        %v336 = vpop.f32.mrb[0].mxu0
        %v337 = vadd.f32 %v232, %v336
        %v338 = vpop.f32.mrb[0].mxu0
        %v339 = vpop.f32.mrb[0].mxu0
        %v340 = vadd.f32 %v232, %v339
        %v341 = vpop.f32.mrb[0].mxu0
        %342 = vdwg.mxu0
        %343 = vst [vmem:[%s203] sm:$0xff] %v329
        %344 = vst [vmem:[%s203 + $0x8] sm:$0xff] %v332
        %345 = vst [vmem:[%s203 + $0x10] sm:$0xff] %v337
        %346 = vst [vmem:[%s203 + $0x18] sm:$0xff] %v340
        %s347 = sand.u32 %s97, 1
        %s348 = scalar_lea.sflag [#allocation4], %s347
        %s349 = sand.u32 %s97, 1
        %s350 = smul.addr %s349, 32
        %s351 = scalar_lea.vmem [#allocation7], %s350
        // Predicated region
        $region41: #{tpu_custom_call.1} parent=31 // pred_check
          %p352 = pneg %p107
        $region42: #{tpu_custom_call.1} parent=31 // pred_check_branch
          %354 = sbr.rel (%p352) target = $region44
        $region43: #{tpu_custom_call.1} parent=31 // pred_region
          %s355 = smul.u32 4, %s21
          %s357 = ssub.s32 512, 512
          %358 = vsyncadd %s348, %s357
          %s359 = smul.addr %s355, 128
          %s360 = scalar_lea.hbm %s3, %s359
          %s361 = sshll.u32 %s351, 4
          %s362 = int_to_ptr.vmem [resolvable:$true] %s361
          %367 = dma.vmem_to_hbm [thread:$0]  %s362, 512, %s360, %s348, 128, 128, 8
        $region44: #{tpu_custom_call.1} parent=31 // pred_fallthru
          _
      $region32: #{tpu_custom_call.1} parent=5 // pred_fallthru
        _
      %p368 = scmp.le.s32.totalorder 2, %s16
      // Predicated region
      $region45: #{tpu_custom_call.1} parent=5 // pred_check
        %p369 = pneg %p368
      $region46: #{tpu_custom_call.1} parent=5 // pred_check_branch
        %371 = sbr.rel (%p369) target = $region48
      $region47: #{tpu_custom_call.1} parent=5 // pred_region
        %s372 = ssub.s32 %s16, 2
        // Predicated region
        $region49: #{tpu_custom_call.1} parent=47 // pred_check
          %p373 = pneg %p113
        $region50: #{tpu_custom_call.1} parent=47 // pred_check_branch
          %375 = sbr.rel (%p373) target = $region52
        $region51: #{tpu_custom_call.1} parent=47 // pred_region
          %s376 = sand.u32 %s98, 1
          %s377 = scalar_lea.sflag [#allocation4], %s376
          %s378 = sand.u32 %s98, 1
          %s379 = smul.addr %s378, 32
          %s380 = scalar_lea.vmem [#allocation7], %s379
          %381 = dma.done %s377, 512
        $region52: #{tpu_custom_call.1} parent=47 // pred_fallthru
          _
      $region48: #{tpu_custom_call.1} parent=5 // pred_fallthru
        _
    $region6: #{tpu_custom_call.1} parent=1 // loop_footer
      %s20 = sadd.s32 1, %s16
    $region7: #{tpu_custom_call.1} parent=1 // loop_footer_branch
      %15 = sbr.rel target = $region3
    $region8: #{tpu_custom_call.1} parent=1 // loop_exit
      _
    %382 = vsyncpa [#allocation3], 1
    %s383 = scalar_lea.sflag [#allocation3], 1
    %384 = vsyncpa %s383, 1
    %385 = vsyncpa [#allocation6], 1
    %386 = vsyncpa [#allocation4], 1
    %s387 = scalar_lea.sflag [#allocation4], 1
    %388 = vsyncpa %s387, 1

</llo_original>
